<compile_context>
chip_gen: v5e
topology: v5e:2x2
jax: 0.10.0
libtpu: 0.0.40
codegen_flags: <defaults>
</compile_context>

<pallas_src>
import functools

import jax
import jax.numpy as jnp
from jax import lax
from jax.experimental import pallas as pl
from jax.experimental.pallas import tpu as pltpu

LANE = 128


def _round_up(x, m):
    return ((x + m - 1) // m) * m


def _batch_tile(n):
    # Split the batch into two tiles when the sublane constraint allows it so
    # the "parallel" grid axis can use both v7x TensorCores (1 tile otherwise).
    if n % 16 == 0:
        return n // 2
    return n


# ----------------------------------------------------------------------------
# Kernel 1: batched input projection  gi = x @ W_ih + b_ih  (all timesteps)
# ----------------------------------------------------------------------------
def _proj_kernel(x_ref, w_ref, b_ref, gi_ref):
    tc, n, i = x_ref.shape
    g = gi_ref.shape[-1]
    x2d = x_ref[...].astype(jnp.float32).reshape(tc * n, i)
    gi = jnp.dot(x2d, w_ref[...].astype(jnp.float32),
                 preferred_element_type=jnp.float32) + b_ref[...]
    gi_ref[...] = gi.reshape(tc, n, g).astype(gi_ref.dtype)


def gru_input_projection(x_seq, wih_p, bih_p, time_chunk):
    tp, n, i = x_seq.shape
    g = wih_p.shape[-1]
    return pl.pallas_call(
        _proj_kernel,
        out_shape=jax.ShapeDtypeStruct((tp, n, g), jnp.float32),
        grid=(tp // time_chunk,),
        in_specs=[
            pl.BlockSpec((time_chunk, n, i), lambda c: (c, 0, 0)),
            pl.BlockSpec((i, g), lambda c: (0, 0)),
            pl.BlockSpec((1, g), lambda c: (0, 0)),
        ],
        out_specs=pl.BlockSpec((time_chunk, n, g), lambda c: (c, 0, 0)),
        compiler_params=pltpu.CompilerParams(
            dimension_semantics=("parallel",)),
    )(x_seq, wih_p, bih_p)


# ----------------------------------------------------------------------------
# Kernel 2: GRU recurrence.  grid = (batch_tiles, time_chunks); the hidden
# state lives in VMEM scratch across the (arbitrary) time-chunk axis.
# ----------------------------------------------------------------------------
def _gru_rec_kernel(gi_ref, m_ref, h0_ref, whh_ref, bhh_ref, y_ref, h_scr):
    c = pl.program_id(1)               # time-chunk axis (last / fastest)
    hp = h_scr.shape[-1]
    tc = gi_ref.shape[0]

    @pl.when(c == 0)
    def _():
        h_scr[...] = h0_ref[...].astype(jnp.float32)

    whh = whh_ref[...].astype(jnp.float32)
    bhh = bhh_ref[...]

    def step(t, h):
        h_prev = h * m_ref[t]                                       # (TN, Hp)
        gi = gi_ref[t]                                              # (TN, 3Hp)
        gh = jnp.dot(h_prev, whh,
                     preferred_element_type=jnp.float32) + bhh      # (TN, 3Hp)
        r = jax.nn.sigmoid(gi[:, :hp] + gh[:, :hp])
        z = jax.nn.sigmoid(gi[:, hp:2 * hp] + gh[:, hp:2 * hp])
        n = jnp.tanh(gi[:, 2 * hp:] + r * gh[:, 2 * hp:])
        h_new = (1.0 - z) * n + z * h_prev
        y_ref[t] = h_new.astype(y_ref.dtype)
        return h_new

    h_scr[...] = lax.fori_loop(0, tc, step, h_scr[...], unroll=True)


def gru_recurrence(gi_seq, m_seq, h0_p, whh_p, bhh_p, time_chunk, batch_tile):
    tp, n, g = gi_seq.shape
    hp = h0_p.shape[-1]
    grid = (n // batch_tile, tp // time_chunk)
    # NOTE: whh/bhh have constant index maps; at large H (e.g. 1024 on v7x)
    # consider single-buffering them (pipeline_mode / one-time DMA to scratch)
    # to avoid double-buffered weight residency in the 64 MiB VMEM.
    return pl.pallas_call(
        _gru_rec_kernel,
        out_shape=jax.ShapeDtypeStruct((tp, n, hp), jnp.float32),
        grid=grid,
        in_specs=[
            pl.BlockSpec((time_chunk, batch_tile, g), lambda b, c: (c, b, 0)),
            pl.BlockSpec((time_chunk, batch_tile, 1), lambda b, c: (c, b, 0)),
            pl.BlockSpec((batch_tile, hp), lambda b, c: (b, 0)),
            pl.BlockSpec((hp, g), lambda b, c: (0, 0)),
            pl.BlockSpec((1, g), lambda b, c: (0, 0)),
        ],
        out_specs=pl.BlockSpec((time_chunk, batch_tile, hp),
                               lambda b, c: (c, b, 0)),
        scratch_shapes=[pltpu.VMEM((batch_tile, hp), jnp.float32)],
        compiler_params=pltpu.CompilerParams(
            dimension_semantics=("parallel", "arbitrary")),
    )(gi_seq, m_seq, h0_p, whh_p, bhh_p)


# ----------------------------------------------------------------------------
# Kernel 3: LayerNorm over the real H lanes of the padded activations, writing
# the compact (T, N, H) output (eps = 1e-5, affine params).
# ----------------------------------------------------------------------------
def _layernorm_kernel(h_real, x_ref, g_ref, b_ref, o_ref):
    x = x_ref[...].astype(jnp.float32)                       # (TC, N, Hp)
    lane = lax.broadcasted_iota(jnp.int32, x.shape, 2)
    valid = lane < h_real
    inv_h = 1.0 / float(h_real)
    mu = jnp.sum(jnp.where(valid, x, 0.0), axis=-1, keepdims=True) * inv_h
    xc = jnp.where(valid, x - mu, 0.0)
    var = jnp.sum(xc * xc, axis=-1, keepdims=True) * inv_h
    y = xc * lax.rsqrt(var + 1e-5) * g_ref[...] + b_ref[...]
    o_ref[...] = y[:, :, :h_real].astype(o_ref.dtype)


def layer_norm_last(y_pad, gamma_p, beta_p, h_real, time_chunk, out_dtype):
    tp, n, hp = y_pad.shape
    return pl.pallas_call(
        functools.partial(_layernorm_kernel, h_real),
        out_shape=jax.ShapeDtypeStruct((tp, n, h_real), out_dtype),
        grid=(tp // time_chunk,),
        in_specs=[
            pl.BlockSpec((time_chunk, n, hp), lambda c: (c, 0, 0)),
            pl.BlockSpec((1, hp), lambda c: (0, 0)),
            pl.BlockSpec((1, hp), lambda c: (0, 0)),
        ],
        out_specs=pl.BlockSpec((time_chunk, n, h_real), lambda c: (c, 0, 0)),
        compiler_params=pltpu.CompilerParams(
            dimension_semantics=("parallel",)),
    )(y_pad, gamma_p, beta_p)


# ----------------------------------------------------------------------------
# Weight padding: lay gates out as three Hp-wide lane-aligned blocks.
# ----------------------------------------------------------------------------
def _pad_gru_layer_params(wih_t, whh_t, b_ih, b_hh, H, Hp, pad_input_rows):
    in_dim = wih_t.shape[0]
    rows = Hp if pad_input_rows else in_dim
    wih_p = jnp.zeros((rows, 3 * Hp), jnp.float32)
    whh_p = jnp.zeros((Hp, 3 * Hp), jnp.float32)
    bih_p = jnp.zeros((1, 3 * Hp), jnp.float32)
    bhh_p = jnp.zeros((1, 3 * Hp), jnp.float32)
    for g in range(3):
        wih_p = wih_p.at[:in_dim, g * Hp:g * Hp + H].set(
            wih_t[:, g * H:(g + 1) * H])
        whh_p = whh_p.at[:H, g * Hp:g * Hp + H].set(
            whh_t[:, g * H:(g + 1) * H])
        bih_p = bih_p.at[0, g * Hp:g * Hp + H].set(b_ih[g * H:(g + 1) * H])
        bhh_p = bhh_p.at[0, g * Hp:g * Hp + H].set(b_hh[g * H:(g + 1) * H])
    return wih_p, bih_p, whh_p, bhh_p


# ----------------------------------------------------------------------------
# Full RNNLayer.forward (GRU path).  Handles both the T==1 branch and the
# sequence branch of the PyTorch module with identical math.
# ----------------------------------------------------------------------------
def rnn_layer_forward(x, hxs, hcs, masks, params, *, time_chunk=16):
    N, L, H = hxs.shape
    T = x.shape[0] // N
    I = x.shape[1]
    Hp = _round_up(H, LANE)
    tc = min(time_chunk, T)
    Tp = _round_up(T, tc)
    tn = _batch_tile(N)

    x_seq = x.reshape(T, N, I).astype(jnp.float32)
    m_seq = masks.reshape(T, N, 1).astype(jnp.float32)
    if Tp != T:
        # padded timesteps only produce discarded y rows; any mask value works
        x_seq = jnp.pad(x_seq, ((0, Tp - T), (0, 0), (0, 0)))
        m_seq = jnp.pad(m_seq, ((0, Tp - T), (0, 0), (0, 0)),
                        constant_values=1.0)

    inp = x_seq
    h_final = []
    for l in range(L):
        wih_p, bih_p, whh_p, bhh_p = _pad_gru_layer_params(
            params["wih_t"][l], params["whh_t"][l],
            params["b_ih"][l], params["b_hh"][l], H, Hp,
            pad_input_rows=(l > 0))
        gi = gru_input_projection(inp, wih_p, bih_p, tc)             # (Tp,N,3Hp)
        h0_p = jnp.pad(hxs[:, l, :].astype(jnp.float32),
                       ((0, 0), (0, Hp - H)))
        y = gru_recurrence(gi, m_seq, h0_p, whh_p, bhh_p, tc, tn)    # (Tp,N,Hp)
        h_final.append(y[T - 1, :, :H])
        inp = y                       # padded lanes are exactly zero

    hxs_out = jnp.stack(h_final, axis=1).astype(hxs.dtype)
    gamma_p = jnp.zeros((1, Hp), jnp.float32).at[0, :H].set(params["gamma"])
    beta_p = jnp.zeros((1, Hp), jnp.float32).at[0, :H].set(params["beta"])
    out = layer_norm_last(inp, gamma_p, beta_p, H, tc, x.dtype)      # (Tp,N,H)
    x_out = out[:T].reshape(T * N, H)
    return x_out, hxs_out, hcs        # hcs passes through unchanged (GRU)


# ----------------------------------------------------------------------------
# Pure-JAX reference (correctness check)
# ----------------------------------------------------------------------------
def rnn_layer_ref(x, hxs, hcs, masks, params):
    N, L, H = hxs.shape
    T = x.shape[0] // N
    x_seq = x.reshape(T, N, -1)
    m_seq = masks.reshape(T, N, 1)
    inp = x_seq
    h_final = []
    for l in range(L):
        wih_t, whh_t = params["wih_t"][l], params["whh_t"][l]
        bih, bhh = params["b_ih"][l], params["b_hh"][l]
        h = hxs[:, l, :]
        ys = []
        for t in range(T):
            hp_ = h * m_seq[t]
            gi = inp[t] @ wih_t + bih
            gh = hp_ @ whh_t + bhh
            r = jax.nn.sigmoid(gi[:, :H] + gh[:, :H])
            z = jax.nn.sigmoid(gi[:, H:2 * H] + gh[:, H:2 * H])
            n = jnp.tanh(gi[:, 2 * H:] + r * gh[:, 2 * H:])
            h = (1.0 - z) * n + z * hp_
            ys.append(h)
        inp = jnp.stack(ys)
        h_final.append(h)
    hxs_out = jnp.stack(h_final, axis=1)
    xf = inp.reshape(T * N, H)
    mu = jnp.mean(xf, axis=-1, keepdims=True)
    var = jnp.mean((xf - mu) ** 2, axis=-1, keepdims=True)
    x_out = (xf - mu) / jnp.sqrt(var + 1e-5) * params["gamma"] + params["beta"]
    return x_out, hxs_out, hcs


# ----------------------------------------------------------------------------
# Parameter init (mirrors the module's __init__): orthogonal weights,
# zero biases, LayerNorm weight=1 / bias=0.
# ----------------------------------------------------------------------------
def init_params(key, inputs_dim, outputs_dim, recurrent_N):
    ortho = jax.nn.initializers.orthogonal()
    wih_t, whh_t, b_ih, b_hh = [], [], [], []
    in_dim = inputs_dim
    for _ in range(recurrent_N):
        key, k1, k2 = jax.random.split(key, 3)
        w_ih = ortho(k1, (3 * outputs_dim, in_dim), jnp.float32)     # (3H, I)
        w_hh = ortho(k2, (3 * outputs_dim, outputs_dim), jnp.float32)
        wih_t.append(w_ih.T)                                         # (I, 3H)
        whh_t.append(w_hh.T)                                         # (H, 3H)
        b_ih.append(jnp.zeros((3 * outputs_dim,), jnp.float32))
        b_hh.append(jnp.zeros((3 * outputs_dim,), jnp.float32))
        in_dim = outputs_dim
    return {"wih_t": wih_t, "whh_t": whh_t, "b_ih": b_ih, "b_hh": b_hh,
            "gamma": jnp.ones((outputs_dim,), jnp.float32),
            "beta": jnp.zeros((outputs_dim,), jnp.float32)}


if __name__ == "__main__":
    key = jax.random.PRNGKey(0)

    T, N = 4, 8               # sequence branch: x.shape[0] = T*N != hxs.shape[0]
    inputs_dim, outputs_dim = 16, 32
    recurrent_N = 2

    kx, kh, kp = jax.random.split(key, 3)
    x = jax.random.normal(kx, (T * N, inputs_dim), jnp.float32)
    hxs = jax.random.normal(kh, (N, recurrent_N, outputs_dim), jnp.float32)
    hcs = jnp.zeros_like(hxs)  # unused for GRU; passed through

    # deterministic masks with some episode resets (zeros)
    masks = jnp.ones((T, N), jnp.float32)
    masks = masks.at[2, 1].set(0.0).at[2, 5].set(0.0).at[0, 3].set(0.0)
    masks = masks.reshape(T * N, 1)

    params = init_params(kp, inputs_dim, outputs_dim, recurrent_N)

    x_out, hxs_out, hcs_out = jax.block_until_ready(
        rnn_layer_forward(x, hxs, hcs, masks, params))

    x_ref, hxs_ref, _ = rnn_layer_ref(x, hxs, hcs, masks, params)
    assert x_out.shape == (T * N, outputs_dim)
    assert hxs_out.shape == (N, recurrent_N, outputs_dim)
    assert jnp.allclose(x_out, x_ref, atol=2e-3, rtol=2e-3)
    assert jnp.allclose(hxs_out, hxs_ref, atol=2e-3, rtol=2e-3)

    print("KERNEL_OK")
</pallas_src>

<mosaic_0001>
module attributes {stable_mosaic.version = 11 : i64} {
  func.func @_proj_kernel(%arg0: i32, %arg1: memref<4x8x16xf32, #tpu.memory_space<vmem>>, %arg2: memref<16x384xf32, #tpu.memory_space<vmem>>, %arg3: memref<1x384xf32, #tpu.memory_space<vmem>>, %arg4: memref<4x8x384xf32, #tpu.memory_space<vmem>>) attributes {dimension_semantics = [#tpu.dimension_semantics<parallel>], iteration_bounds = array<i64: 1>, scalar_prefetch = 0 : i64, scratch_operands = 0 : i64, tpu.core_type = #tpu.core_type<tc>, window_params = [{transform_indices = @transform_0, window_bounds = array<i64: 4, 8, 16>}, {pipeline_mode = #tpu.pipeline_mode<synchronous>, transform_indices = @transform_1, window_bounds = array<i64: 16, 384>}, {pipeline_mode = #tpu.pipeline_mode<synchronous>, transform_indices = @transform_2, window_bounds = array<i64: 1, 384>}, {transform_indices = @transform_3, window_bounds = array<i64: 4, 8, 384>}]} {
    %c0 = arith.constant 0 : index
    %c0_0 = arith.constant 0 : index
    %c0_1 = arith.constant 0 : index
    %0 = vector.load %arg1[%c0, %c0_0, %c0_1] : memref<4x8x16xf32, #tpu.memory_space<vmem>>, vector<4x8x16xf32>
    %1 = vector.shape_cast %0 : vector<4x8x16xf32> to vector<32x16xf32>
    %c0_2 = arith.constant 0 : index
    %c0_3 = arith.constant 0 : index
    %2 = vector.load %arg2[%c0_2, %c0_3] : memref<16x384xf32, #tpu.memory_space<vmem>>, vector<16x384xf32>
    %cst = arith.constant dense<0.000000e+00> : vector<32x384xf32>
    %3 = tpu.matmul %1, %2, %cst {dimension_numbers = #tpu.dot_dimension_numbers<[1], [0], [0], [1], [0, 0, 1, 1], [], []>} : vector<32x16xf32>, vector<16x384xf32>, vector<32x384xf32> -> vector<32x384xf32>
    %c0_4 = arith.constant 0 : index
    %c0_5 = arith.constant 0 : index
    %4 = vector.load %arg3[%c0_4, %c0_5] : memref<1x384xf32, #tpu.memory_space<vmem>>, vector<1x384xf32>
    %5 = vector.broadcast %4 : vector<1x384xf32> to vector<32x384xf32>
    %6 = arith.addf %3, %5 : vector<32x384xf32>
    %7 = vector.shape_cast %6 : vector<32x384xf32> to vector<4x8x384xf32>
    %c0_6 = arith.constant 0 : index
    %c0_7 = arith.constant 0 : index
    %c0_8 = arith.constant 0 : index
    %8 = vector.load %arg4[%c0_6, %c0_7, %c0_8] : memref<4x8x384xf32, #tpu.memory_space<vmem>>, vector<4x8x384xf32>
    tpu.vector_store %arg4[%c0_6, %c0_7, %c0_8], %7 {strides = array<i32>} : memref<4x8x384xf32, #tpu.memory_space<vmem>>, vector<4x8x384xf32>,
    return
  }
  func.func @transform_0(%arg0: i32) -> (i32, i32, i32) {
    %c0_i32 = arith.constant 0 : i32
    %c0_i32_0 = arith.constant 0 : i32
    %c0_i32_1 = arith.constant 0 : i32
    return %arg0, %c0_i32, %c0_i32_0 : i32, i32, i32
  }
  func.func @transform_1(%arg0: i32) -> (i32, i32) {
    %c0_i32 = arith.constant 0 : i32
    %c0_i32_0 = arith.constant 0 : i32
    %c0_i32_1 = arith.constant 0 : i32
    return %c0_i32, %c0_i32_0 : i32, i32
  }
  func.func @transform_2(%arg0: i32) -> (i32, i32) {
    %c0_i32 = arith.constant 0 : i32
    %c0_i32_0 = arith.constant 0 : i32
    %c0_i32_1 = arith.constant 0 : i32
    return %c0_i32, %c0_i32_0 : i32, i32
  }
  func.func @transform_3(%arg0: i32) -> (i32, i32, i32) {
    %c0_i32 = arith.constant 0 : i32
    %c0_i32_0 = arith.constant 0 : i32
    %c0_i32_1 = arith.constant 0 : i32
    return %arg0, %c0_i32, %c0_i32_0 : i32, i32, i32
  }
}

</mosaic_0001>

<llo_original>
// kernel: tpu_custom_call.1
$region0: #{tpu_custom_call.1}
  #allocation0 [shape = 'u32[]', space=smem, size = 0x4, offset = 0x4, fixed_abs, tag = 'smem constant byte address 0x4 - core index']
  #allocation1 [shape = 'u32[72,128]{1,0:T(1,128)}', space=vmem, size = 0x9000, scoped, tag = 'internal scratch']
  %s0 = inlined_call_operand.hbm [shape: f32[4,8,16], index: 0, kind: input, shape index: {}]
  %s1 = inlined_call_operand.hbm [shape: f32[16,384], index: 1, kind: input, shape index: {}]
  %s2 = inlined_call_operand.hbm [shape: f32[1,384], index: 2, kind: input, shape index: {}]
  %s3 = inlined_call_operand.hbm [shape: f32[4,8,384], index: 3, kind: output, shape index: {}]
  %s4 = sld [smem:[#allocation0]]
  $region34: #{tpu_custom_call.1} parent=0
    _
  %s6 = ssub.s32 1, %s4
  %s7 = scalar_select 0, %s6, %s4
  $region1: #{tpu_custom_call.1} parent=0
    #allocation2 [shape = 'u8[16384]{0}', space=vmem, size = 0x4000, scoped, tag = 'input window, operand 0, single buffered']
    #allocation3 [shape = 's32[1]{0}', space=sflag, size = 0x4, scoped, tag = 'scoped memory for tpu_custom_call.1']
    #allocation4 [shape = 's32[1]{0}', space=sflag, size = 0x4, scoped, tag = 'scoped memory for tpu_custom_call.1']
    #allocation5 [shape = 'u8[24576]{0}', space=vmem, size = 0x6000, scoped, tag = 'input window, operand 1, single buffered']
    #allocation6 [shape = 's32[1]{0}', space=sflag, size = 0x4, scoped, tag = 'scoped memory for tpu_custom_call.1']
    #allocation7 [shape = 'u8[1536]{0}', space=vmem, size = 0x800, scoped, tag = 'input window, operand 2, single buffered']
    #allocation8 [shape = 'u8[49152]{0}', space=vmem, size = 0xc000, scoped, tag = 'output window, operand 0, single buffered']
    %8 = vsyncpa [#allocation3], 0
    %9 = vsyncpa [#allocation6], 0
    %10 = vsyncpa [#allocation4], 0
    // Predicated region
    $region2: #{tpu_custom_call.1} parent=1 // pred_check
      _
    $region3: #{tpu_custom_call.1} parent=1 // pred_check_branch
      %12 = sbr.rel (0) target = $region5
    $region4: #{tpu_custom_call.1} parent=1 // pred_region
      %14 = vsyncadd [#allocation3], 0
      %s15 = sshll.u32 %s0, 4
      %s16 = int_to_ptr.hbm [resolvable:$true] %s15
      %s17 = sshll.u32 [#allocation2], 4
      %s18 = int_to_ptr.vmem [resolvable:$true] %s17
      %23 = dma.hbm_to_vmem [thread:$0]  %s16, 512, %s18, [#allocation3], 128, 128, 8
    $region5: #{tpu_custom_call.1} parent=1 // pred_fallthru
      _
    // Predicated region
    $region6: #{tpu_custom_call.1} parent=1 // pred_check
      _
    $region7: #{tpu_custom_call.1} parent=1 // pred_check_branch
      %25 = sbr.rel (0) target = $region9
    $region8: #{tpu_custom_call.1} parent=1 // pred_region
      %27 = vsyncadd [#allocation6], 0
      %s28 = sshll.u32 %s1, 4
      %s29 = int_to_ptr.hbm [resolvable:$true] %s28
      %s30 = sshll.u32 [#allocation5], 4
      %s31 = int_to_ptr.vmem [resolvable:$true] %s30
      %36 = dma.hbm_to_vmem [thread:$0]  %s29, 768, %s31, [#allocation6], 384, 384, 24
    $region9: #{tpu_custom_call.1} parent=1 // pred_fallthru
      _
    // Predicated region
    $region10: #{tpu_custom_call.1} parent=1 // pred_check
      _
    $region11: #{tpu_custom_call.1} parent=1 // pred_check_branch
      %38 = sbr.rel (0) target = $region13
    $region12: #{tpu_custom_call.1} parent=1 // pred_region
      %40 = vsyncadd [#allocation6], 0
      %s42 = sshll.u32 %s2, 4
      %s43 = int_to_ptr.hbm [resolvable:$true] %s42
      %s44 = sshll.u32 [#allocation7], 4
      %s45 = int_to_ptr.vmem [resolvable:$true] %s44
      %47 = dma.hbm_to_vmem [thread:$0]  %s43, 48, %s45, [#allocation6]
    $region13: #{tpu_custom_call.1} parent=1 // pred_fallthru
      _
    // Predicated region
    $region14: #{tpu_custom_call.1} parent=1 // pred_check
      _
    $region15: #{tpu_custom_call.1} parent=1 // pred_check_branch
      %49 = sbr.rel (0) target = $region17
    $region16: #{tpu_custom_call.1} parent=1 // pred_region
      %51 = dma.done [#allocation3], 512
    $region17: #{tpu_custom_call.1} parent=1 // pred_fallthru
      _
    // Predicated region
    $region18: #{tpu_custom_call.1} parent=1 // pred_check
      _
    $region19: #{tpu_custom_call.1} parent=1 // pred_check_branch
      %53 = sbr.rel (0) target = $region21
    $region20: #{tpu_custom_call.1} parent=1 // pred_region
      %55 = dma.done [#allocation6], 768
    $region21: #{tpu_custom_call.1} parent=1 // pred_fallthru
      _
    // Predicated region
    $region22: #{tpu_custom_call.1} parent=1 // pred_check
      _
    $region23: #{tpu_custom_call.1} parent=1 // pred_check_branch
      %57 = sbr.rel (0) target = $region25
    $region24: #{tpu_custom_call.1} parent=1 // pred_region
      %59 = dma.done [#allocation6], 48
    $region25: #{tpu_custom_call.1} parent=1 // pred_fallthru
      _
    %v60 = vld [vmem:[#allocation2] sm:$0xff]
    %v61 = vld [vmem:[#allocation2 + $0x8] sm:$0xff]
    %v62 = vld [vmem:[#allocation2 + $0x10] sm:$0xff]
    %v63 = vld [vmem:[#allocation2 + $0x18] sm:$0xff]
    %v64 = vld [vmem:[#allocation5] sm:$0xff]
    %v65 = vld [vmem:[#allocation5 + $0x8] sm:$0xff]
    %v66 = vld [vmem:[#allocation5 + $0x10] sm:$0xff]
    %v67 = vld [vmem:[#allocation5 + $0x18] sm:$0xff]
    %v68 = vld [vmem:[#allocation5 + $0x20] sm:$0xff]
    %v69 = vld [vmem:[#allocation5 + $0x28] sm:$0xff]
    %v70 = vld [vmem:[#allocation7] sm:$0x7]
    %v72 = vperm.slane %v70, 0
    %v73 = vperm.slane %v70, 1
    %v74 = vperm.slane %v70, 2
    %vm78 = vcmask 130048
    %v80 = vsel %vm78, %v60, 0
    %v83 = vsel %vm78, %v61, 0
    %v86 = vsel %vm78, %v62, 0
    %v89 = vsel %vm78, %v63, 0
    %91 = vmatpush.msra.mxu0 0.0
    %92 = vmatpush.msra.mxu0 0.0
    %93 = vmatpush.msra.mxu0 0.0
    %94 = vmatpush.msra.mxu0 0.0
    %95 = vmatpush.msra.mxu0 0.0
    %96 = vmatpush.msra.mxu0 0.0
    %97 = vmatpush.msra.mxu0 0.0
    %98 = vmatpush.msra.mxu0 0.0
    %99 = vmatpush.msra.mxu0 0.0
    %100 = vmatpush.msra.mxu0 0.0
    %101 = vmatpush.msra.mxu0 0.0
    %102 = vmatpush.msra.mxu0 0.0
    %103 = vmatpush.msra.mxu0 0.0
    %104 = vmatpush.msra.mxu0 0.0
    %105 = vmatpush.msra.mxu0 %v67
    %106 = vmatpush.msra.mxu0 %v64
    %107 = vmatmul.f32.gmra.mxu0 %v80
    %v108 = vpop.f32.mrf.mxu0
    %v109 = vadd.f32 %v72, %v108
    %110 = vmatmul.f32.gmra.mxu0 %v83
    %v111 = vpop.f32.mrf.mxu0
    %v112 = vadd.f32 %v72, %v111
    %113 = vmatmul.f32.gmra.mxu0 %v86
    %v114 = vpop.f32.mrf.mxu0
    %v115 = vadd.f32 %v72, %v114
    %116 = vmatmul.f32.gmra.mxu0 %v89
    %v117 = vpop.f32.mrf.mxu0
    %v118 = vadd.f32 %v72, %v117
    %119 = vdwg.mxu0
    %120 = vmatpush.msra.mxu0 0.0
    %121 = vmatpush.msra.mxu0 0.0
    %122 = vmatpush.msra.mxu0 0.0
    %123 = vmatpush.msra.mxu0 0.0
    %124 = vmatpush.msra.mxu0 0.0
    %125 = vmatpush.msra.mxu0 0.0
    %126 = vmatpush.msra.mxu0 0.0
    %127 = vmatpush.msra.mxu0 0.0
    %128 = vmatpush.msra.mxu0 0.0
    %129 = vmatpush.msra.mxu0 0.0
    %130 = vmatpush.msra.mxu0 0.0
    %131 = vmatpush.msra.mxu0 0.0
    %132 = vmatpush.msra.mxu0 0.0
    %133 = vmatpush.msra.mxu0 0.0
    %134 = vmatpush.msra.mxu0 %v68
    %135 = vmatpush.msra.mxu0 %v65
    %136 = vmatmul.f32.gmra.mxu0 %v80
    %v137 = vpop.f32.mrf.mxu0
    %v138 = vadd.f32 %v73, %v137
    %139 = vmatmul.f32.gmra.mxu0 %v83
    %v140 = vpop.f32.mrf.mxu0
    %v141 = vadd.f32 %v73, %v140
    %142 = vmatmul.f32.gmra.mxu0 %v86
    %v143 = vpop.f32.mrf.mxu0
    %v144 = vadd.f32 %v73, %v143
    %145 = vmatmul.f32.gmra.mxu0 %v89
    %v146 = vpop.f32.mrf.mxu0
    %v147 = vadd.f32 %v73, %v146
    %148 = vdwg.mxu0
    %149 = vmatpush.msra.mxu0 0.0
    %150 = vmatpush.msra.mxu0 0.0
    %151 = vmatpush.msra.mxu0 0.0
    %152 = vmatpush.msra.mxu0 0.0
    %153 = vmatpush.msra.mxu0 0.0
    %154 = vmatpush.msra.mxu0 0.0
    %155 = vmatpush.msra.mxu0 0.0
    %156 = vmatpush.msra.mxu0 0.0
    %157 = vmatpush.msra.mxu0 0.0
    %158 = vmatpush.msra.mxu0 0.0
    %159 = vmatpush.msra.mxu0 0.0
    %160 = vmatpush.msra.mxu0 0.0
    %161 = vmatpush.msra.mxu0 0.0
    %162 = vmatpush.msra.mxu0 0.0
    %163 = vmatpush.msra.mxu0 %v69
    %164 = vmatpush.msra.mxu0 %v66
    %165 = vmatmul.f32.gmra.mxu0 %v80
    %v166 = vpop.f32.mrf.mxu0
    %v167 = vadd.f32 %v74, %v166
    %168 = vmatmul.f32.gmra.mxu0 %v83
    %v169 = vpop.f32.mrf.mxu0
    %v170 = vadd.f32 %v74, %v169
    %171 = vmatmul.f32.gmra.mxu0 %v86
    %v172 = vpop.f32.mrf.mxu0
    %v173 = vadd.f32 %v74, %v172
    %174 = vmatmul.f32.gmra.mxu0 %v89
    %v175 = vpop.f32.mrf.mxu0
    %v176 = vadd.f32 %v74, %v175
    %177 = vdwg.mxu0
    %178 = vst [vmem:[#allocation8] sm:$0xff] %v109
    %179 = vst [vmem:[#allocation8 + $0x8] sm:$0xff] %v138
    %180 = vst [vmem:[#allocation8 + $0x10] sm:$0xff] %v167
    %181 = vst [vmem:[#allocation8 + $0x18] sm:$0xff] %v112
    %182 = vst [vmem:[#allocation8 + $0x20] sm:$0xff] %v141
    %183 = vst [vmem:[#allocation8 + $0x28] sm:$0xff] %v170
    %184 = vst [vmem:[#allocation8 + $0x30] sm:$0xff] %v115
    %185 = vst [vmem:[#allocation8 + $0x38] sm:$0xff] %v144
    %186 = vst [vmem:[#allocation8 + $0x40] sm:$0xff] %v173
    %187 = vst [vmem:[#allocation8 + $0x48] sm:$0xff] %v118
    %188 = vst [vmem:[#allocation8 + $0x50] sm:$0xff] %v147
    %189 = vst [vmem:[#allocation8 + $0x58] sm:$0xff] %v176
    // Predicated region
    $region26: #{tpu_custom_call.1} parent=1 // pred_check
      _
    $region27: #{tpu_custom_call.1} parent=1 // pred_check_branch
      %191 = sbr.rel (0) target = $region29
    $region28: #{tpu_custom_call.1} parent=1 // pred_region
      %193 = vsyncadd [#allocation4], 0
      %s194 = sshll.u32 [#allocation8], 4
      %s195 = int_to_ptr.vmem [resolvable:$true] %s194
      %s196 = sshll.u32 %s3, 4
      %s197 = int_to_ptr.hbm [resolvable:$true] %s196
      %202 = dma.vmem_to_hbm [thread:$0]  %s195, 1536, %s197, [#allocation4], 384, 384, 24
    $region29: #{tpu_custom_call.1} parent=1 // pred_fallthru
      _
    // Predicated region
    $region30: #{tpu_custom_call.1} parent=1 // pred_check
      _
    $region31: #{tpu_custom_call.1} parent=1 // pred_check_branch
      %204 = sbr.rel (0) target = $region33
    $region32: #{tpu_custom_call.1} parent=1 // pred_region
      %206 = dma.done [#allocation4], 1536
    $region33: #{tpu_custom_call.1} parent=1 // pred_fallthru
      _
    %207 = vsyncpa [#allocation3], 1
    %208 = vsyncpa [#allocation6], 1
    %209 = vsyncpa [#allocation4], 1

</llo_original>
